<compile_context>
chip_gen: v7x
topology: tpu7x:2x2x1
jax: 0.10.0
libtpu: 0.0.40
codegen_flags: <defaults>
</compile_context>

<pallas_src>
import functools

import jax
import jax.numpy as jnp
from jax.experimental import pallas as pl
from jax.experimental.pallas import tpu as pltpu


# ----------------------------------------------------------------------------
# Fused kernel: one (batch, row-slab) tile of
#   base 3x3 conv + ReLU  ->  RPN 3x3 conv + ReLU  ->  fused 1x1 heads.
#
# Channel-major layout: activations are (C, positions) with positions flattened as
# lane index p = 1 + lh*W + w, where lh indexes the slab rows INCLUDING a 1-row halo
# on each side (global h = h0 - 1 + lh) and lanes 0 / NPOS-1 are guard lanes.
# A 3x3 tap (di, dj) of the second conv then reads lanes [di*W + dj, di*W + dj + Th*W);
# column wrap across row boundaries is killed by the in-kernel left/right masks.
# ----------------------------------------------------------------------------
def _fused_frcnn_kernel(x_ref, wb_ref, bb_ref, wr_ref, br_ref, wh_ref, bh_ref,
                        o_ref, *, W, Th, NT):
    ThW = Th * W
    NPOS = x_ref.shape[-1]                 # (Th+2)*W + 2
    t = pl.program_id(1)

    # ---- layer 1: base conv as ONE K=9*Cin matmul (im2col built in the wrapper) ----
    base = jnp.dot(wb_ref[...], x_ref[...], preferred_element_type=jnp.float32)
    base = jnp.maximum(base + bb_ref[...], 0.0)            # (Cb, NPOS) f32

    # Zero the positions that are conv-2's zero padding (image top/bottom rows at the
    # first/last slab) and the two guard lanes.  Single iota-mask select, no scratch.
    lane = jax.lax.broadcasted_iota(jnp.int32, (1, NPOS), 1)
    lo = jnp.where(t == 0, W + 1, 1)
    hi = jnp.where(t == NT - 1, (Th + 1) * W + 1, NPOS - 1)
    base = jnp.where((lane >= lo) & (lane < hi), base, 0.0).astype(jnp.bfloat16)

    # Wrap masks (output column w == 0 has no left tap, w == W-1 no right tap),
    # generated in-kernel and hoisted out of the tap loop.
    r = jax.lax.broadcasted_iota(jnp.int32, (1, ThW), 1)
    w_idx = r % W
    ml = (w_idx != 0).astype(jnp.bfloat16)
    mr = (w_idx != W - 1).astype(jnp.bfloat16)

    # ---- layer 2: im2col along the contraction (sublane) dim -> ONE K=9*Cb matmul ----
    slabs = []
    for di in range(3):
        for dj in range(3):
            off = di * W + dj
            sl = base[:, off:off + ThW]                    # (Cb, ThW) bf16, static slice
            if dj == 0:
                sl = sl * ml
            elif dj == 2:
                sl = sl * mr
            slabs.append(sl)
    col2 = jnp.concatenate(slabs, axis=0)                  # (9*Cb, ThW) bf16
    rpn = jnp.dot(wr_ref[...], col2, preferred_element_type=jnp.float32)
    rpn = jnp.maximum(rpn + br_ref[...], 0.0).astype(jnp.bfloat16)   # (Cr, ThW)

    # ---- fused 1x1 heads, channel-major output (NCHW falls out for free) ----
    heads = jnp.dot(wh_ref[...], rpn, preferred_element_type=jnp.float32) + bh_ref[...]
    o_ref[...] = heads.astype(o_ref.dtype)                 # (NHp, ThW)


def _pick_th(H, W):
    """Row-slab height: H%Th==0 and Th*W a multiple of 128 (lane-dense output blocks)."""
    cands = [th for th in range(1, H + 1) if H % th == 0 and (th * W) % 128 == 0]
    if not cands:
        return H                                  # single full-extent slab (still legal)
    small = [th for th in cands if th < H]
    if small:
        big = [th for th in small if th * W >= 512]
        return min(big) if big else min(small)
    return H


# ----------------------------------------------------------------------------
# Forward wrapper: one input layout/im2col pass, one free output reshape.
# ----------------------------------------------------------------------------
def faster_rcnn_forward(params, imgs_nchw, *, num_joints):
    B, Cin, H, W = imgs_nchw.shape
    HW = H * W
    Th = _pick_th(H, W)
    NT = H // Th
    K1 = 9 * Cin
    NPOS = (Th + 2) * W + 2
    # Halo invariant: the largest tap offset (2W+2) exactly fits the slab padding.
    assert NPOS - Th * W == 2 * W + 2
    assert NT == 1 or (Th * W) % 128 == 0

    # reference: assert imgs.isnan().sum() == 0 -> returned as a traced count,
    # computed from the same NHWC copy used below (fused with the layout pass).
    x = jnp.transpose(imgs_nchw, (0, 2, 3, 1)).astype(jnp.float32)     # (B,H,W,Cin)
    nan_count = jnp.isnan(x).sum()

    # Layer-1 im2col in the wrapper.  Position canvas covers h in [-1, H] so each
    # row-slab's 1-row halo is real neighbor data (edge rows are zeroed in-kernel).
    xp = jnp.pad(x, ((0, 0), (2, 2), (1, 1), (0, 0)))                  # (B,H+4,W+2,Cin)
    cols = jnp.concatenate(
        [xp[:, di:di + H + 2, dj:dj + W, :] for di in range(3) for dj in range(3)],
        axis=-1)                                                       # (B,H+2,W,9*Cin)
    flat = cols.reshape(B, (H + 2) * W, K1)
    # Overlapping row-slab windows (+1 guard position front/back), channel-major, bf16.
    wins = jnp.stack(
        [flat[:, t * Th * W:(t * Th + Th + 2) * W, :] for t in range(NT)], axis=1)
    wins = jnp.pad(wins, ((0, 0), (0, 0), (1, 1), (0, 0)))             # (B,NT,NPOS,K1)
    xwin = jnp.transpose(wins, (0, 1, 3, 2)).astype(jnp.bfloat16)      # (B,NT,K1,NPOS)

    wb, bb = params["wb"], params["bb"]
    wr, br = params["wr"], params["br"]
    wh, bh = params["wh"], params["bh"]
    Cb, Cr, NHp = wb.shape[0], wr.shape[0], wh.shape[0]

    kernel = functools.partial(_fused_frcnn_kernel, W=W, Th=Th, NT=NT)
    out = pl.pallas_call(
        kernel,
        out_shape=jax.ShapeDtypeStruct((B, NHp, HW), jnp.float32),
        grid=(B, NT),
        in_specs=[
            pl.BlockSpec((None, None, K1, NPOS), lambda b, t: (b, t, 0, 0)),  # im2col win
            pl.BlockSpec((Cb, K1), lambda b, t: (0, 0)),                      # base conv W
            pl.BlockSpec((Cb, 1), lambda b, t: (0, 0)),                       # base bias
            pl.BlockSpec((Cr, 9 * Cb), lambda b, t: (0, 0)),                  # RPN conv W
            pl.BlockSpec((Cr, 1), lambda b, t: (0, 0)),                       # RPN bias
            pl.BlockSpec((NHp, Cr), lambda b, t: (0, 0)),                     # fused heads W
            pl.BlockSpec((NHp, 1), lambda b, t: (0, 0)),                      # fused heads b
        ],
        out_specs=pl.BlockSpec((None, NHp, Th * W), lambda b, t: (b, 0, t)),
        compiler_params=pltpu.CompilerParams(
            dimension_semantics=("parallel", "parallel")),
    )(xwin, wb, bb, wr, br, wh, bh)

    out = out.reshape(B, NHp, H, W)            # channel-major output -> NCHW for free
    n_off, n_conf = num_joints * 3, num_joints
    # TODO(synk): _RPN loss terms against pose_gt / hand_type are not defined in the
    # reference snippet; we return the RPN head maps instead.
    return {
        "offset": out[:, :n_off],
        "confidence": out[:, n_off:n_off + n_conf],
        "handedness": out[:, n_off + n_conf:n_off + n_conf + 2],
        "nan_count": nan_count,
    }


class FasterRCNNPallas:
    def __init__(self, num_joints=21, in_channels=4, dout_base_model=32,
                 rpn_channels=32, seed=0):
        self.num_joints = num_joints
        key = jax.random.PRNGKey(seed)
        ks = jax.random.split(key, 5)

        def normal(k, shape, std):
            return std * jax.random.normal(k, shape, jnp.float32)

        n_off, n_conf, n_hand = num_joints * 3, num_joints, 2
        n_heads = n_off + n_conf + n_hand                    # 86
        nh_pad = ((n_heads + 7) // 8) * 8                    # 88: sublane-aligned only

        # RCNN_base 3x3 conv (Cin -> dout_base_model), tap-major/channel-minor K layout.
        wb = normal(ks[0], (dout_base_model, 9 * in_channels), 0.02)
        # RPN trunk 3x3 conv (dout_base_model -> rpn_channels).
        wr = normal(ks[1], (rpn_channels, 9 * dout_base_model), 0.02)
        # Heads: 1x1 convs, normal_init(0, 0.01), zero bias (per _init_weights),
        # fused + sublane-padded into one channel-major weight matrix.
        w_off = normal(ks[2], (n_off, rpn_channels), 0.01)
        w_conf = normal(ks[3], (n_conf, rpn_channels), 0.01)
        w_hand = normal(ks[4], (n_hand, rpn_channels), 0.01)
        wh = jnp.zeros((nh_pad, rpn_channels), jnp.float32)
        wh = wh.at[:n_off].set(w_off)
        wh = wh.at[n_off:n_off + n_conf].set(w_conf)
        wh = wh.at[n_off + n_conf:n_heads].set(w_hand)

        self.params = {
            "wb": wb.astype(jnp.bfloat16),
            "bb": jnp.zeros((dout_base_model, 1), jnp.float32),
            "wr": wr.astype(jnp.bfloat16),
            "br": jnp.zeros((rpn_channels, 1), jnp.float32),
            "wh": wh.astype(jnp.bfloat16),
            "bh": jnp.zeros((nh_pad, 1), jnp.float32),
        }
        self._forward = jax.jit(
            functools.partial(faster_rcnn_forward, num_joints=num_joints))

    def __call__(self, imgs_nchw, pose_gt=None, hand_type=None):
        if hand_type is None:
            hand_type = jnp.ones((1, 2), jnp.float32)
        return self._forward(self.params, imgs_nchw)


if __name__ == "__main__":
    key = jax.random.PRNGKey(0)
    k_img, k_pose = jax.random.split(key)

    B, C, H, W = 2, 4, 16, 16
    num_joints = 21
    imgs = jax.random.normal(k_img, (B, C, H, W), jnp.float32)
    pose_gt = jax.random.normal(k_pose, (B, num_joints * 2, 3), jnp.float32)
    hand_type = jnp.ones((1, 2), jnp.float32)

    model = FasterRCNNPallas(num_joints=num_joints, in_channels=C)
    out = model(imgs, pose_gt, hand_type)
    out = jax.block_until_ready(out)

    assert out["offset"].shape == (B, num_joints * 3, H, W)
    assert out["confidence"].shape == (B, num_joints, H, W)
    assert out["handedness"].shape == (B, 2, H, W)
    assert int(out["nan_count"]) == 0
    print("KERNEL_OK")
</pallas_src>

<mosaic_0001>
module attributes {stable_mosaic.version = 11 : i64} {
  func.func @_fused_frcnn_kernel(%arg0: i32, %arg1: i32, %arg2: memref<1x1x36x162xbf16, #tpu.memory_space<vmem>>, %arg3: memref<32x36xbf16, #tpu.memory_space<vmem>>, %arg4: memref<32x1xf32, #tpu.memory_space<vmem>>, %arg5: memref<32x288xbf16, #tpu.memory_space<vmem>>, %arg6: memref<32x1xf32, #tpu.memory_space<vmem>>, %arg7: memref<88x32xbf16, #tpu.memory_space<vmem>>, %arg8: memref<88x1xf32, #tpu.memory_space<vmem>>, %arg9: memref<1x88x128xf32, #tpu.memory_space<vmem>>) attributes {dimension_semantics = [#tpu.dimension_semantics<parallel>, #tpu.dimension_semantics<parallel>], iteration_bounds = array<i64: 2, 2>, scalar_prefetch = 0 : i64, scratch_operands = 0 : i64, tpu.core_type = #tpu.core_type<tc>, window_params = [{transform_indices = @transform_0, window_bounds = array<i64: 1, 1, 36, 162>}, {pipeline_mode = #tpu.pipeline_mode<synchronous>, transform_indices = @transform_1, window_bounds = array<i64: 32, 36>}, {pipeline_mode = #tpu.pipeline_mode<synchronous>, transform_indices = @transform_2, window_bounds = array<i64: 32, 1>}, {pipeline_mode = #tpu.pipeline_mode<synchronous>, transform_indices = @transform_3, window_bounds = array<i64: 32, 288>}, {pipeline_mode = #tpu.pipeline_mode<synchronous>, transform_indices = @transform_4, window_bounds = array<i64: 32, 1>}, {pipeline_mode = #tpu.pipeline_mode<synchronous>, transform_indices = @transform_5, window_bounds = array<i64: 88, 32>}, {pipeline_mode = #tpu.pipeline_mode<synchronous>, transform_indices = @transform_6, window_bounds = array<i64: 88, 1>}, {transform_indices = @transform_7, window_bounds = array<i64: 1, 88, 128>}]} {
    %c0 = arith.constant 0 : index
    %c0_0 = arith.constant 0 : index
    %0 = vector.load %arg3[%c0, %c0_0] : memref<32x36xbf16, #tpu.memory_space<vmem>>, vector<32x36xbf16>
    %c0_1 = arith.constant 0 : index
    %c0_2 = arith.constant 0 : index
    %c0_3 = arith.constant 0 : index
    %c0_4 = arith.constant 0 : index
    %1 = vector.load %arg2[%c0_1, %c0_2, %c0_3, %c0_4] : memref<1x1x36x162xbf16, #tpu.memory_space<vmem>>, vector<1x1x36x162xbf16>
    %2 = vector.shape_cast %1 : vector<1x1x36x162xbf16> to vector<36x162xbf16>
    %cst = arith.constant dense<0.000000e+00> : vector<32x162xf32>
    %3 = tpu.matmul %0, %2, %cst {dimension_numbers = #tpu.dot_dimension_numbers<[1], [0], [0], [1], [0, 0, 1, 1], [], []>} : vector<32x36xbf16>, vector<36x162xbf16>, vector<32x162xf32> -> vector<32x162xf32>
    %c0_5 = arith.constant 0 : index
    %c0_6 = arith.constant 0 : index
    %4 = vector.load %arg4[%c0_5, %c0_6] : memref<32x1xf32, #tpu.memory_space<vmem>>, vector<32x1xf32>
    %5 = vector.broadcast %4 : vector<32x1xf32> to vector<32x162xf32>
    %6 = arith.addf %3, %5 : vector<32x162xf32>
    %cst_7 = arith.constant 0.000000e+00 : f32
    %7 = vector.broadcast %cst_7 : f32 to vector<32x162xf32>
    %8 = arith.maximumf %6, %7 : vector<32x162xf32>
    %9 = tpu.iota {dimensions = array<i32: 1>} : vector<1x162xi32>
    %c0_i32 = arith.constant 0 : i32
    %10 = arith.cmpi eq, %arg1, %c0_i32 : i32
    %c17_i32 = arith.constant 17 : i32
    %c1_i32 = arith.constant 1 : i32
    %11 = arith.select %10, %c17_i32, %c1_i32 : i32
    %c1_i32_8 = arith.constant 1 : i32
    %12 = arith.cmpi eq, %arg1, %c1_i32_8 : i32
    %c145_i32 = arith.constant 145 : i32
    %c161_i32 = arith.constant 161 : i32
    %13 = arith.select %12, %c145_i32, %c161_i32 : i32
    %14 = vector.broadcast %11 : i32 to vector<1x162xi32>
    %15 = arith.cmpi sge, %9, %14 : vector<1x162xi32>
    %16 = vector.broadcast %13 : i32 to vector<1x162xi32>
    %17 = arith.cmpi slt, %9, %16 : vector<1x162xi32>
    %18 = arith.andi %15, %17 : vector<1x162xi1>
    %cst_9 = arith.constant 0.000000e+00 : f32
    %19 = vector.shape_cast %18 : vector<1x162xi1> to vector<1x162xi1>
    %20 = vector.broadcast %19 : vector<1x162xi1> to vector<32x162xi1>
    %21 = vector.broadcast %cst_9 : f32 to vector<32x162xf32>
    %22 = arith.select %20, %8, %21 : vector<32x162xi1>, vector<32x162xf32>
    %23 = arith.truncf %22 : vector<32x162xf32> to vector<32x162xbf16>
    %24 = tpu.iota {dimensions = array<i32: 1>} : vector<1x128xi32>
    %c16_i32 = arith.constant 16 : i32
    %c0_i32_10 = arith.constant 0 : i32
    %25 = arith.cmpi eq, %c16_i32, %c0_i32_10 : i32
    %c1_i32_11 = arith.constant 1 : i32
    %26 = arith.select %25, %c1_i32_11, %c16_i32 : i32
    %27 = vector.broadcast %26 : i32 to vector<1x128xi32>
    %28 = arith.remsi %24, %27 : vector<1x128xi32>
    %c0_i32_12 = arith.constant 0 : i32
    %29 = vector.broadcast %c0_i32_12 : i32 to vector<1x128xi32>
    %30 = arith.cmpi ne, %28, %29 : vector<1x128xi32>
    %c0_i32_13 = arith.constant 0 : i32
    %31 = vector.broadcast %c0_i32_13 : i32 to vector<1x128xi32>
    %32 = arith.cmpi slt, %28, %31 : vector<1x128xi32>
    %c0_i32_14 = arith.constant 0 : i32
    %33 = arith.cmpi slt, %26, %c0_i32_14 : i32
    %34 = vector.broadcast %33 : i1 to vector<1x128xi1>
    %35 = vector.broadcast %34 : vector<1x128xi1> to vector<1x128xi1>
    %36 = arith.xori %32, %35 : vector<1x128xi1>
    %37 = arith.andi %36, %30 : vector<1x128xi1>
    %38 = vector.broadcast %26 : i32 to vector<1x128xi32>
    %39 = arith.addi %28, %38 : vector<1x128xi32>
    %40 = arith.select %37, %39, %28 : vector<1x128xi1>, vector<1x128xi32>
    %c0_i32_15 = arith.constant 0 : i32
    %41 = vector.broadcast %c0_i32_15 : i32 to vector<1x128xi32>
    %42 = arith.cmpi ne, %40, %41 : vector<1x128xi32>
    %43 = arith.extui %42 : vector<1x128xi1> to vector<1x128xi32>
    %44 = arith.sitofp %43 : vector<1x128xi32> to vector<1x128xf32>
    %45 = arith.truncf %44 : vector<1x128xf32> to vector<1x128xbf16>
    %c15_i32 = arith.constant 15 : i32
    %46 = vector.broadcast %c15_i32 : i32 to vector<1x128xi32>
    %47 = arith.cmpi ne, %40, %46 : vector<1x128xi32>
    %48 = arith.extui %47 : vector<1x128xi1> to vector<1x128xi32>
    %49 = arith.sitofp %48 : vector<1x128xi32> to vector<1x128xf32>
    %50 = arith.truncf %49 : vector<1x128xf32> to vector<1x128xbf16>
    %51 = vector.extract_strided_slice %23 {offsets = [0, 0], sizes = [32, 128], strides = [1, 1]} : vector<32x162xbf16> to vector<32x128xbf16>
    %52 = vector.broadcast %45 : vector<1x128xbf16> to vector<32x128xbf16>
    %53 = arith.mulf %51, %52 : vector<32x128xbf16>
    %54 = vector.extract_strided_slice %23 {offsets = [0, 1], sizes = [32, 128], strides = [1, 1]} : vector<32x162xbf16> to vector<32x128xbf16>
    %55 = vector.extract_strided_slice %23 {offsets = [0, 2], sizes = [32, 128], strides = [1, 1]} : vector<32x162xbf16> to vector<32x128xbf16>
    %56 = vector.broadcast %50 : vector<1x128xbf16> to vector<32x128xbf16>
    %57 = arith.mulf %55, %56 : vector<32x128xbf16>
    %58 = vector.extract_strided_slice %23 {offsets = [0, 16], sizes = [32, 128], strides = [1, 1]} : vector<32x162xbf16> to vector<32x128xbf16>
    %59 = vector.broadcast %45 : vector<1x128xbf16> to vector<32x128xbf16>
    %60 = arith.mulf %58, %59 : vector<32x128xbf16>
    %61 = vector.extract_strided_slice %23 {offsets = [0, 17], sizes = [32, 128], strides = [1, 1]} : vector<32x162xbf16> to vector<32x128xbf16>
    %62 = vector.extract_strided_slice %23 {offsets = [0, 18], sizes = [32, 128], strides = [1, 1]} : vector<32x162xbf16> to vector<32x128xbf16>
    %63 = vector.broadcast %50 : vector<1x128xbf16> to vector<32x128xbf16>
    %64 = arith.mulf %62, %63 : vector<32x128xbf16>
    %65 = vector.extract_strided_slice %23 {offsets = [0, 32], sizes = [32, 128], strides = [1, 1]} : vector<32x162xbf16> to vector<32x128xbf16>
    %66 = vector.broadcast %45 : vector<1x128xbf16> to vector<32x128xbf16>
    %67 = arith.mulf %65, %66 : vector<32x128xbf16>
    %68 = vector.extract_strided_slice %23 {offsets = [0, 33], sizes = [32, 128], strides = [1, 1]} : vector<32x162xbf16> to vector<32x128xbf16>
    %69 = vector.extract_strided_slice %23 {offsets = [0, 34], sizes = [32, 128], strides = [1, 1]} : vector<32x162xbf16> to vector<32x128xbf16>
    %70 = vector.broadcast %50 : vector<1x128xbf16> to vector<32x128xbf16>
    %71 = arith.mulf %69, %70 : vector<32x128xbf16>
    %72 = tpu.concatenate %53, %54, %57, %60, %61, %64, %67, %68, %71 in 0 : vector<32x128xbf16>, vector<32x128xbf16>, vector<32x128xbf16>, vector<32x128xbf16>, vector<32x128xbf16>, vector<32x128xbf16>, vector<32x128xbf16>, vector<32x128xbf16>, vector<32x128xbf16> -> vector<288x128xbf16>
    %c0_16 = arith.constant 0 : index
    %c0_17 = arith.constant 0 : index
    %73 = vector.load %arg5[%c0_16, %c0_17] : memref<32x288xbf16, #tpu.memory_space<vmem>>, vector<32x288xbf16>
    %cst_18 = arith.constant dense<0.000000e+00> : vector<32x128xf32>
    %74 = tpu.matmul %73, %72, %cst_18 {dimension_numbers = #tpu.dot_dimension_numbers<[1], [0], [0], [1], [0, 0, 1, 1], [], []>} : vector<32x288xbf16>, vector<288x128xbf16>, vector<32x128xf32> -> vector<32x128xf32>
    %c0_19 = arith.constant 0 : index
    %c0_20 = arith.constant 0 : index
    %75 = vector.load %arg6[%c0_19, %c0_20] : memref<32x1xf32, #tpu.memory_space<vmem>>, vector<32x1xf32>
    %76 = vector.broadcast %75 : vector<32x1xf32> to vector<32x128xf32>
    %77 = arith.addf %74, %76 : vector<32x128xf32>
    %cst_21 = arith.constant 0.000000e+00 : f32
    %78 = vector.broadcast %cst_21 : f32 to vector<32x128xf32>
    %79 = arith.maximumf %77, %78 : vector<32x128xf32>
    %80 = arith.truncf %79 : vector<32x128xf32> to vector<32x128xbf16>
    %c0_22 = arith.constant 0 : index
    %c0_23 = arith.constant 0 : index
    %81 = vector.load %arg7[%c0_22, %c0_23] : memref<88x32xbf16, #tpu.memory_space<vmem>>, vector<88x32xbf16>
    %cst_24 = arith.constant dense<0.000000e+00> : vector<88x128xf32>
    %82 = tpu.matmul %81, %80, %cst_24 {dimension_numbers = #tpu.dot_dimension_numbers<[1], [0], [0], [1], [0, 0, 1, 1], [], []>} : vector<88x32xbf16>, vector<32x128xbf16>, vector<88x128xf32> -> vector<88x128xf32>
    %c0_25 = arith.constant 0 : index
    %c0_26 = arith.constant 0 : index
    %83 = vector.load %arg8[%c0_25, %c0_26] : memref<88x1xf32, #tpu.memory_space<vmem>>, vector<88x1xf32>
    %84 = vector.broadcast %83 : vector<88x1xf32> to vector<88x128xf32>
    %85 = arith.addf %82, %84 : vector<88x128xf32>
    %c0_27 = arith.constant 0 : index
    %c0_28 = arith.constant 0 : index
    %c0_29 = arith.constant 0 : index
    %86 = vector.load %arg9[%c0_27, %c0_28, %c0_29] : memref<1x88x128xf32, #tpu.memory_space<vmem>>, vector<1x88x128xf32>
    %87 = vector.shape_cast %86 : vector<1x88x128xf32> to vector<88x128xf32>
    %88 = vector.shape_cast %85 : vector<88x128xf32> to vector<1x88x128xf32>
    tpu.vector_store %arg9[%c0_27, %c0_28, %c0_29], %88 {strides = array<i32>} : memref<1x88x128xf32, #tpu.memory_space<vmem>>, vector<1x88x128xf32>,
    return
  }
  func.func @transform_0(%arg0: i32, %arg1: i32) -> (i32, i32, i32, i32) {
    %c0_i32 = arith.constant 0 : i32
    %c0_i32_0 = arith.constant 0 : i32
    %c0_i32_1 = arith.constant 0 : i32
    return %arg0, %arg1, %c0_i32, %c0_i32_0 : i32, i32, i32, i32
  }
  func.func @transform_1(%arg0: i32, %arg1: i32) -> (i32, i32) {
    %c0_i32 = arith.constant 0 : i32
    %c0_i32_0 = arith.constant 0 : i32
    %c0_i32_1 = arith.constant 0 : i32
    return %c0_i32, %c0_i32_0 : i32, i32
  }
  func.func @transform_2(%arg0: i32, %arg1: i32) -> (i32, i32) {
    %c0_i32 = arith.constant 0 : i32
    %c0_i32_0 = arith.constant 0 : i32
    %c0_i32_1 = arith.constant 0 : i32
    return %c0_i32, %c0_i32_0 : i32, i32
  }
  func.func @transform_3(%arg0: i32, %arg1: i32) -> (i32, i32) {
    %c0_i32 = arith.constant 0 : i32
    %c0_i32_0 = arith.constant 0 : i32
    %c0_i32_1 = arith.constant 0 : i32
    return %c0_i32, %c0_i32_0 : i32, i32
  }
  func.func @transform_4(%arg0: i32, %arg1: i32) -> (i32, i32) {
    %c0_i32 = arith.constant 0 : i32
    %c0_i32_0 = arith.constant 0 : i32
    %c0_i32_1 = arith.constant 0 : i32
    return %c0_i32, %c0_i32_0 : i32, i32
  }
  func.func @transform_5(%arg0: i32, %arg1: i32) -> (i32, i32) {
    %c0_i32 = arith.constant 0 : i32
    %c0_i32_0 = arith.constant 0 : i32
    %c0_i32_1 = arith.constant 0 : i32
    return %c0_i32, %c0_i32_0 : i32, i32
  }
  func.func @transform_6(%arg0: i32, %arg1: i32) -> (i32, i32) {
    %c0_i32 = arith.constant 0 : i32
    %c0_i32_0 = arith.constant 0 : i32
    %c0_i32_1 = arith.constant 0 : i32
    return %c0_i32, %c0_i32_0 : i32, i32
  }
  func.func @transform_7(%arg0: i32, %arg1: i32) -> (i32, i32, i32) {
    %c0_i32 = arith.constant 0 : i32
    %c0_i32_0 = arith.constant 0 : i32
    return %arg0, %c0_i32, %arg1 : i32, i32, i32
  }
}

</mosaic_0001>

<llo_original>
// kernel: faster_rcnn_forward.1
$region0: #{faster_rcnn_forward.1}
  #allocation0 [shape = 'u32[]', space=smem, size = 0x4, offset = 0x4, fixed_abs, tag = 'smem constant byte address 0x4 - core index']
  #allocation1 [shape = 'u32[144,128]{1,0:T(1,128)}', space=vmem, size = 0x12000, scoped, tag = 'internal scratch']
  %s0 = inlined_call_operand.vmem [shape: bf16[2,2,36,162], index: 0, kind: input, shape index: {}]
  %s1 = inlined_call_operand.vmem [shape: bf16[32,36], index: 1, kind: input, shape index: {}]
  %s2 = inlined_call_operand.vmem [shape: f32[32,1], index: 2, kind: input, shape index: {}]
  %s3 = inlined_call_operand.vmem [shape: bf16[32,288], index: 3, kind: input, shape index: {}]
  %s4 = inlined_call_operand.vmem [shape: f32[32,1], index: 4, kind: input, shape index: {}]
  %s5 = inlined_call_operand.vmem [shape: bf16[88,32], index: 5, kind: input, shape index: {}]
  %s6 = inlined_call_operand.vmem [shape: f32[88,1], index: 6, kind: input, shape index: {}]
  %s7 = inlined_call_operand.vmem [shape: f32[2,88,256], index: 7, kind: output, shape index: {}]
  %s8 = sld [smem:[#allocation0]]
  $region95: #{faster_rcnn_forward.1} parent=0
    _
  %s10 = ssub.s32 1, %s8
  %s11 = scalar_select 0, %s10, %s8
  $region1: #{faster_rcnn_forward.1} parent=0
    #allocation2 [shape = 'u8[90112]{0}', space=vmem, size = 0x16000, scoped, tag = 'output window, operand 0']
    loop: start=0, step=1, limit=6
    $region2: #{faster_rcnn_forward.1} parent=1 // loop_pre_header
      _
    $region3: #{faster_rcnn_forward.1} parent=1 // loop_header
      %s13 = sphi 0, %s17
      %p14 = scmp.ge.s32.totalorder %s13, 6
      %s20 = sphi 0, %s32
      %s21 = sphi 0, %s28
      %s22 = sphi 0, %s20
      %s23 = sphi 0, %s21
      %s24 = sphi 0, %s22
      %s25 = sphi 0, %s23
      %s37 = sphi 0, %s39
      %s40 = sphi 0, %s37
      %s41 = sphi 0, %s40
      %s57 = sphi 0, %s41
      %s61 = sphi 0, %s61
      %s63 = sphi 0, %s61
      %s64 = sphi 0, %s63
      %s78 = sphi 0, %s64
      %s82 = sphi 0, %s82
      %s84 = sphi 0, %s82
      %s85 = sphi 0, %s84
      %s99 = sphi 0, %s85
      %s103 = sphi 0, %s103
      %s105 = sphi 0, %s103
      %s106 = sphi 0, %s105
      %s120 = sphi 0, %s106
      %s124 = sphi 0, %s124
      %s126 = sphi 0, %s124
      %s127 = sphi 0, %s126
      %s141 = sphi 0, %s127
      %s145 = sphi 0, %s145
      %s147 = sphi 0, %s145
      %s148 = sphi 0, %s147
      %s162 = sphi 0, %s148
      %s166 = sphi 0, %s166
      %s168 = sphi 0, %s166
      %s169 = sphi 0, %s168
      %s183 = sphi 0, %s169
      %s191 = sphi 0, %s193
      %s194 = sphi 0, %s191
      %s195 = sphi 0, %s194
      %s211 = sphi 0, %s195
    $region4: #{faster_rcnn_forward.1} parent=1 // loop_header_branch
      %16 = sbr.rel (%p14) target = $region8
    $region5: #{faster_rcnn_forward.1} parent=1 // loop_body
      %s18 = ssub.s32 %s13, 1
      %s19 = ssub.s32 %s13, 2
      %s26 = sadd.s32 1, %s21
      %p27 = scmp.ge.s32.totalorder %s26, 2
      %s28 = scalar_select %p27, 0, %s26
      %s29 = sadd.s32 1, %s20
      %s30 = scalar_select %p27, %s29, %s20
      %p31 = scmp.ge.s32.totalorder %s30, 2
      %s32 = scalar_select %p31, 0, %s30
      %s33 = ssub.s32 %s20, %s32
      %s34 = ssub.s32 %s21, %s28
      %s35 = sor.u32 %s33, %s34
      %p36 = scmp.eq.s32.totalorder %s35, 0
      %s38 = sadd.s32 %s37, 1
      %s39 = scalar_select %p36, %s37, %s38
      %p42 = pneg %p36
      %p43 = scmp.eq.s32.totalorder %s13, 3
      %p44 = por %p42, %p43
      %p45 = scmp.ne.s32.totalorder %s37, %s40
      %p46 = scmp.eq.s32.totalorder %s13, 0
      %p47 = por %p45, %p46
      %p48 = scmp.ne.s32.totalorder %s37, %s40
      %p49 = scmp.eq.s32.totalorder %s18, 3
      %p50 = por %p48, %p49
      %p51 = scmp.ne.s32.totalorder %s40, %s41
      %p52 = scmp.eq.s32.totalorder %s18, 0
      %p53 = por %p51, %p52
      %p54 = scmp.ne.s32.totalorder %s40, %s41
      %p55 = scmp.eq.s32.totalorder %s19, 3
      %p56 = por %p54, %p55
      %p58 = scmp.ne.s32.totalorder %s41, %s57
      %p59 = scmp.eq.s32.totalorder %s19, 0
      %p60 = por %p58, %p59
      %s62 = sadd.s32 %s61, 1
      %p65 = scmp.eq.s32.totalorder %s13, 3
      %p66 = scmp.ne.s32.totalorder %s61, %s63
      %p67 = scmp.eq.s32.totalorder %s13, 0
      %p68 = por %p66, %p67
      %p69 = scmp.ne.s32.totalorder %s61, %s63
      %p70 = scmp.eq.s32.totalorder %s18, 3
      %p71 = por %p69, %p70
      %p72 = scmp.ne.s32.totalorder %s63, %s64
      %p73 = scmp.eq.s32.totalorder %s18, 0
      %p74 = por %p72, %p73
      %p75 = scmp.ne.s32.totalorder %s63, %s64
      %p76 = scmp.eq.s32.totalorder %s19, 3
      %p77 = por %p75, %p76
      %p79 = scmp.ne.s32.totalorder %s64, %s78
      %p80 = scmp.eq.s32.totalorder %s19, 0
      %p81 = por %p79, %p80
      %s83 = sadd.s32 %s82, 1
      %p86 = scmp.eq.s32.totalorder %s13, 3
      %p87 = scmp.ne.s32.totalorder %s82, %s84
      %p88 = scmp.eq.s32.totalorder %s13, 0
      %p89 = por %p87, %p88
      %p90 = scmp.ne.s32.totalorder %s82, %s84
      %p91 = scmp.eq.s32.totalorder %s18, 3
      %p92 = por %p90, %p91
      %p93 = scmp.ne.s32.totalorder %s84, %s85
      %p94 = scmp.eq.s32.totalorder %s18, 0
      %p95 = por %p93, %p94
      %p96 = scmp.ne.s32.totalorder %s84, %s85
      %p97 = scmp.eq.s32.totalorder %s19, 3
      %p98 = por %p96, %p97
      %p100 = scmp.ne.s32.totalorder %s85, %s99
      %p101 = scmp.eq.s32.totalorder %s19, 0
      %p102 = por %p100, %p101
      %s104 = sadd.s32 %s103, 1
      %p107 = scmp.eq.s32.totalorder %s13, 3
      %p108 = scmp.ne.s32.totalorder %s103, %s105
      %p109 = scmp.eq.s32.totalorder %s13, 0
      %p110 = por %p108, %p109
      %p111 = scmp.ne.s32.totalorder %s103, %s105
      %p112 = scmp.eq.s32.totalorder %s18, 3
      %p113 = por %p111, %p112
      %p114 = scmp.ne.s32.totalorder %s105, %s106
      %p115 = scmp.eq.s32.totalorder %s18, 0
      %p116 = por %p114, %p115
      %p117 = scmp.ne.s32.totalorder %s105, %s106
      %p118 = scmp.eq.s32.totalorder %s19, 3
      %p119 = por %p117, %p118
      %p121 = scmp.ne.s32.totalorder %s106, %s120
      %p122 = scmp.eq.s32.totalorder %s19, 0
      %p123 = por %p121, %p122
      %s125 = sadd.s32 %s124, 1
      %p128 = scmp.eq.s32.totalorder %s13, 3
      %p129 = scmp.ne.s32.totalorder %s124, %s126
      %p130 = scmp.eq.s32.totalorder %s13, 0
      %p131 = por %p129, %p130
      %p132 = scmp.ne.s32.totalorder %s124, %s126
      %p133 = scmp.eq.s32.totalorder %s18, 3
      %p134 = por %p132, %p133
      %p135 = scmp.ne.s32.totalorder %s126, %s127
      %p136 = scmp.eq.s32.totalorder %s18, 0
      %p137 = por %p135, %p136
      %p138 = scmp.ne.s32.totalorder %s126, %s127
      %p139 = scmp.eq.s32.totalorder %s19, 3
      %p140 = por %p138, %p139
      %p142 = scmp.ne.s32.totalorder %s127, %s141
      %p143 = scmp.eq.s32.totalorder %s19, 0
      %p144 = por %p142, %p143
      %s146 = sadd.s32 %s145, 1
      %p149 = scmp.eq.s32.totalorder %s13, 3
      %p150 = scmp.ne.s32.totalorder %s145, %s147
      %p151 = scmp.eq.s32.totalorder %s13, 0
      %p152 = por %p150, %p151
      %p153 = scmp.ne.s32.totalorder %s145, %s147
      %p154 = scmp.eq.s32.totalorder %s18, 3
      %p155 = por %p153, %p154
      %p156 = scmp.ne.s32.totalorder %s147, %s148
      %p157 = scmp.eq.s32.totalorder %s18, 0
      %p158 = por %p156, %p157
      %p159 = scmp.ne.s32.totalorder %s147, %s148
      %p160 = scmp.eq.s32.totalorder %s19, 3
      %p161 = por %p159, %p160
      %p163 = scmp.ne.s32.totalorder %s148, %s162
      %p164 = scmp.eq.s32.totalorder %s19, 0
      %p165 = por %p163, %p164
      %s167 = sadd.s32 %s166, 1
      %p170 = scmp.eq.s32.totalorder %s13, 3
      %p171 = scmp.ne.s32.totalorder %s166, %s168
      %p172 = scmp.eq.s32.totalorder %s13, 0
      %p173 = por %p171, %p172
      %p174 = scmp.ne.s32.totalorder %s166, %s168
      %p175 = scmp.eq.s32.totalorder %s18, 3
      %p176 = por %p174, %p175
      %p177 = scmp.ne.s32.totalorder %s168, %s169
      %p178 = scmp.eq.s32.totalorder %s18, 0
      %p179 = por %p177, %p178
      %p180 = scmp.ne.s32.totalorder %s168, %s169
      %p181 = scmp.eq.s32.totalorder %s19, 3
      %p182 = por %p180, %p181
      %p184 = scmp.ne.s32.totalorder %s169, %s183
      %p185 = scmp.eq.s32.totalorder %s19, 0
      %p186 = por %p184, %p185
      %s187 = ssub.s32 %s20, %s32
      %s188 = ssub.s32 %s21, %s28
      %s189 = sor.u32 %s187, %s188
      %p190 = scmp.eq.s32.totalorder %s189, 0
      %s192 = sadd.s32 %s191, 1
      %s193 = scalar_select %p190, %s191, %s192
      %p196 = pneg %p190
      %p197 = scmp.eq.s32.totalorder %s13, 3
      %p198 = por %p196, %p197
      %p199 = scmp.ne.s32.totalorder %s191, %s194
      %p200 = scmp.eq.s32.totalorder %s13, 0
      %p201 = por %p199, %p200
      %p202 = scmp.ne.s32.totalorder %s191, %s194
      %p203 = scmp.eq.s32.totalorder %s18, 3
      %p204 = por %p202, %p203
      %p205 = scmp.ne.s32.totalorder %s194, %s195
      %p206 = scmp.eq.s32.totalorder %s18, 0
      %p207 = por %p205, %p206
      %p208 = scmp.ne.s32.totalorder %s194, %s195
      %p209 = scmp.eq.s32.totalorder %s19, 3
      %p210 = por %p208, %p209
      %p212 = scmp.ne.s32.totalorder %s195, %s211
      %p213 = scmp.eq.s32.totalorder %s19, 0
      %p214 = por %p212, %p213
      %p215 = scmp.le.s32.totalorder 1, %s13
      %p216 = scmp.lt.s32.totalorder %s13, 5
      %p217 = pnand %p215, %p216
      %p218 = pneg %p217
      // Predicated region
      $region9: #{faster_rcnn_forward.1} parent=5 // pred_check
        _
      $region10: #{faster_rcnn_forward.1} parent=5 // pred_check_branch
        %220 = sbr.rel (%p217) target = $region12
      $region11: #{faster_rcnn_forward.1} parent=5 // pred_region
        %s221 = ssub.s32 %s13, 1
        // Predicated region
        $region13: #{faster_rcnn_forward.1} parent=11 // pred_check
          %p222 = pneg %p74
        $region14: #{faster_rcnn_forward.1} parent=11 // pred_check_branch
          %224 = sbr.rel (%p222) target = $region16
        $region15: #{faster_rcnn_forward.1} parent=11 // pred_region
          _
        $region16: #{faster_rcnn_forward.1} parent=11 // pred_fallthru
          _
        // Predicated region
        $region17: #{faster_rcnn_forward.1} parent=11 // pred_check
          %p225 = pneg %p95
        $region18: #{faster_rcnn_forward.1} parent=11 // pred_check_branch
          %227 = sbr.rel (%p225) target = $region20
        $region19: #{faster_rcnn_forward.1} parent=11 // pred_region
          _
        $region20: #{faster_rcnn_forward.1} parent=11 // pred_fallthru
          _
        // Predicated region
        $region21: #{faster_rcnn_forward.1} parent=11 // pred_check
          %p228 = pneg %p116
        $region22: #{faster_rcnn_forward.1} parent=11 // pred_check_branch
          %230 = sbr.rel (%p228) target = $region24
        $region23: #{faster_rcnn_forward.1} parent=11 // pred_region
          _
        $region24: #{faster_rcnn_forward.1} parent=11 // pred_fallthru
          _
        // Predicated region
        $region25: #{faster_rcnn_forward.1} parent=11 // pred_check
          %p231 = pneg %p137
        $region26: #{faster_rcnn_forward.1} parent=11 // pred_check_branch
          %233 = sbr.rel (%p231) target = $region28
        $region27: #{faster_rcnn_forward.1} parent=11 // pred_region
          _
        $region28: #{faster_rcnn_forward.1} parent=11 // pred_fallthru
          _
        // Predicated region
        $region29: #{faster_rcnn_forward.1} parent=11 // pred_check
          %p234 = pneg %p158
        $region30: #{faster_rcnn_forward.1} parent=11 // pred_check_branch
          %236 = sbr.rel (%p234) target = $region32
        $region31: #{faster_rcnn_forward.1} parent=11 // pred_region
          _
        $region32: #{faster_rcnn_forward.1} parent=11 // pred_fallthru
          _
        // Predicated region
        $region33: #{faster_rcnn_forward.1} parent=11 // pred_check
          %p237 = pneg %p179
        $region34: #{faster_rcnn_forward.1} parent=11 // pred_check_branch
          %239 = sbr.rel (%p237) target = $region36
        $region35: #{faster_rcnn_forward.1} parent=11 // pred_region
          _
        $region36: #{faster_rcnn_forward.1} parent=11 // pred_fallthru
          _
      $region12: #{faster_rcnn_forward.1} parent=5 // pred_fallthru
        _
      %p240 = scmp.lt.s32.totalorder %s13, 4
      // Predicated region
      $region37: #{faster_rcnn_forward.1} parent=5 // pred_check
        %p241 = pneg %p240
      $region38: #{faster_rcnn_forward.1} parent=5 // pred_check_branch
        %243 = sbr.rel (%p241) target = $region40
      $region39: #{faster_rcnn_forward.1} parent=5 // pred_region
        // Predicated region
        $region41: #{faster_rcnn_forward.1} parent=39 // pred_check
          %p244 = pneg %p47
        $region42: #{faster_rcnn_forward.1} parent=39 // pred_check_branch
          %246 = sbr.rel (%p244) target = $region44
        $region43: #{faster_rcnn_forward.1} parent=39 // pred_region
          %p247 = scmp.lt.s32.totalorder %s20, 1
          %s248 = scalar_select %p247, %s20, 1
          %p249 = scmp.lt.s32.totalorder %s21, 1
          %s250 = scalar_select %p249, %s21, 1
          %s251 = smul.addr %s250, 10
          %s252 = smul.addr %s248, 20
          %s253 = sadd.s32 %s251, %s252
          %s254 = smul.addr %s253, 4
          %s255 = scalar_lea.vmem %s0, %s254
        $region44: #{faster_rcnn_forward.1} parent=39 // pred_fallthru
          _
      $region40: #{faster_rcnn_forward.1} parent=5 // pred_fallthru
        _
      %p256 = scmp.le.s32.totalorder 1, %s13
      %p257 = scmp.lt.s32.totalorder %s13, 5
      %p258 = pnand %p256, %p257
      %p259 = pneg %p258
      // Predicated region
      $region45: #{faster_rcnn_forward.1} parent=5 // pred_check
        _
      $region46: #{faster_rcnn_forward.1} parent=5 // pred_check_branch
        %261 = sbr.rel (%p258) target = $region48
      $region47: #{faster_rcnn_forward.1} parent=5 // pred_region
        %s262 = ssub.s32 %s13, 1
        %p263 = scmp.lt.s32.totalorder %s22, 1
        %s264 = scalar_select %p263, %s22, 1
        %p265 = scmp.lt.s32.totalorder %s23, 1
        %s266 = scalar_select %p265, %s23, 1
        %s267 = smul.addr %s266, 10
        %s268 = smul.addr %s264, 20
        %s269 = sadd.s32 %s267, %s268
        %s270 = smul.addr %s269, 4
        %s271 = scalar_lea.vmem %s0, %s270
        %p272 = pneg %p53
        %p273 = pneg %p50
        %p274 = pneg %p74
        %p275 = pneg %p71
        %p276 = pneg %p95
        %p277 = pneg %p92
        %p278 = pneg %p116
        %p279 = pneg %p113
        %p280 = pneg %p137
        %p281 = pneg %p134
        %p282 = pneg %p158
        %p283 = pneg %p155
        %p284 = pneg %p179
        %p285 = pneg %p176
        %p286 = pneg %p207
        %p287 = pneg %p204
        %s288 = sand.u32 %s194, 1
        %s289 = sand.u32 %s194, 1
        %s290 = smul.addr %s289, 88
        %s291 = scalar_lea.vmem [#allocation2], %s290
        %p292 = scmp.lt.s32.totalorder %s22, 1
        %s293 = scalar_select %p292, %s22, 1
        %p294 = scmp.lt.s32.totalorder %s23, 1
        %s295 = scalar_select %p294, %s23, 1
        %s296 = smul.addr %s295, 10
        %s297 = smul.addr %s293, 20
        %s298 = sadd.s32 %s296, %s297
        %s299 = smul.addr %s298, 4
        %s300 = scalar_lea.vmem %s0, %s299
        %v302 = vld [vmem:[%s1] sm:$0xf]
        %v303 = vld [vmem:[%s1 + $0x4] sm:$0xf]
        %v304 = vld [vmem:[%s1 + $0x8] sm:$0xf]
        %v305 = vld [vmem:[%s1 + $0xc] sm:$0xf]
        %v306 = vld [vmem:[%s300] sm:$0xff]
        %v307 = vld [vmem:[%s300 + $0x8] sm:$0xff]
        %v308 = vld [vmem:[%s300 + $0x10] sm:$0xff]
        %v309 = vld [vmem:[%s300 + $0x18] sm:$0xff]
        %v310 = vld [vmem:[%s300 + $0x20] sm:$0x33]
        %v311 = vld [vmem:[%s2] sm:$0xff]
        %v312 = vld [vmem:[%s2 + $0x8] sm:$0xff]
        %v313 = vld [vmem:[%s2 + $0x10] sm:$0xff]
        %v314 = vld [vmem:[%s2 + $0x18] sm:$0xff]
        %316 = vset.pattern.permute.xlu0 0
        %317 = vperm.xlu0 %316, %v311
        %v318 = vpop.permute.xlu0 %317
        %321 = vset.pattern.permute.xlu0 0
        %322 = vperm.xlu0 %321, %v312
        %v323 = vpop.permute.xlu0 %322
        %326 = vset.pattern.permute.xlu0 0
        %327 = vperm.xlu0 %326, %v313
        %v328 = vpop.permute.xlu0 %327
        %331 = vset.pattern.permute.xlu0 0
        %332 = vperm.xlu0 %331, %v314
        %v333 = vpop.permute.xlu0 %332
        %v339 = vunpack.c.l.b16 %v302
        %v340 = vunpack.c.l.b16 %v303
        %v341 = vunpack.c.l.b16 %v304
        %v342 = vunpack.c.l.b16 %v305
        %v343 = vpack.c.b16 %v340, %v339
        %v344 = vpack.c.b16 %v342, %v341
        %v350 = vunpack.c.l.b16 %v306
        %v351 = vunpack.c.h.b16 %v306
        %v352 = vunpack.c.l.b16 %v307
        %v353 = vunpack.c.h.b16 %v307
        %v354 = vunpack.c.l.b16 %v308
        %v355 = vunpack.c.h.b16 %v308
        %v356 = vunpack.c.l.b16 %v309
        %v357 = vunpack.c.h.b16 %v309
        %v358 = vunpack.c.l.b16 %v310
        %v359 = vunpack.c.h.b16 %v310
        %v360 = vpack.c.b16 %v352, %v350
        %v361 = vpack.c.b16 %v353, %v351
        %v362 = vpack.c.b16 %v356, %v354
        %v363 = vpack.c.b16 %v357, %v355
        %v364 = vpack.c.b16 %v358, %v358
        %v365 = vpack.c.b16 %v359, %v359
        %vm370 = vcmask 293888
        %v372 = vsel %vm370, %v343, 0
        %v375 = vsel %vm370, %v344, 0
        %vm377 = vcmask 1041408
        %v379 = vsel %vm377, %v364, 0
        %v382 = vsel %vm377, %v365, 0
        %384 = vmatprep.subr.bf16.mxu0 %v361
        %385 = vmatpush1.bf16.msra.mxu0 %v360
        %386 = vmatprep.subr.bf16.mxu0 %v363
        %387 = vmatpush1.bf16.msra.mxu0 %v362
        %388 = vmatprep.subr.bf16.mxu0 %v382
        %389 = vmatpush1.bf16.msra.mxu0 %v379
        %390 = vmatprep.subr.bf16.mxu0 0
        %391 = vmatpush1.bf16.msra.mxu0 0
        %392 = vmatprep.subr.bf16.mxu0 0
        %393 = vmatpush1.bf16.msra.mxu0 0
        %394 = vmatprep.subr.bf16.mxu0 0
        %395 = vmatpush1.bf16.msra.mxu0 0
        %396 = vmatprep.subr.bf16.mxu0 0
        %397 = vmatpush1.bf16.msra.mxu0 0
        %398 = vmatprep.subr.bf16.mxu0 0
        %399 = vmatpush1.bf16.msra.mxu0 0
        %400 = vmatprep.subr.bf16.mxu0 0
        %401 = vmatpush1.bf16.msra.mxu0 0
        %402 = vmatprep.subr.bf16.mxu0 0
        %403 = vmatpush1.bf16.msra.mxu0 0
        %404 = vmatprep.subr.bf16.mxu0 0
        %405 = vmatpush1.bf16.msra.mxu0 0
        %406 = vmatprep.subr.bf16.mxu0 0
        %407 = vmatpush1.bf16.msra.mxu0 0
        %408 = vmatprep.subr.bf16.mxu0 0
        %409 = vmatpush1.bf16.msra.mxu0 0
        %410 = vmatprep.subr.bf16.mxu0 0
        %411 = vmatpush1.bf16.msra.mxu0 0
        %412 = vmatprep.subr.bf16.mxu0 0
        %413 = vmatpush1.bf16.msra.mxu0 0
        %414 = vmatprep.subr.bf16.mxu0 0
        %415 = vmatpush1.bf16.msra.mxu0 0
        %416 = vmatprep.mubr.bf16.mxu0 0
        %417 = vmatmul.mubr.bf16.gmra.mrb[0].mxu0 %v372
        %v418 = vpop.f32.mrb[0].mxu0
        %v419 = vadd.f32 %v318, %v418
        %v420 = vpop.f32.mrb[0].mxu0
        %v421 = vadd.f32 %v318, %v420
        %v422 = vpop.f32.mrb[0].mxu0
        %v423 = vadd.f32 %v323, %v422
        %v424 = vpop.f32.mrb[0].mxu0
        %v425 = vadd.f32 %v323, %v424
        %426 = vmatprep.mubr.bf16.mxu0 0
        %427 = vmatmul.mubr.bf16.gmra.mrb[0].mxu0 %v375
        %v428 = vpop.f32.mrb[0].mxu0
        %v429 = vadd.f32 %v328, %v428
        %v430 = vpop.f32.mrb[0].mxu0
        %v431 = vadd.f32 %v328, %v430
        %v432 = vpop.f32.mrb[0].mxu0
        %v433 = vadd.f32 %v333, %v432
        %v434 = vpop.f32.mrb[0].mxu0
        %v435 = vadd.f32 %v333, %v434
        %436 = vdwg.mxu0
        %v437 = vmax.f32 %v419, 0.0
        %v438 = vmax.f32 %v421, 0.0
        %v439 = vmax.f32 %v423, 0.0
        %v440 = vmax.f32 %v425, 0.0
        %v441 = vmax.f32 %v429, 0.0
        %v442 = vmax.f32 %v431, 0.0
        %v443 = vmax.f32 %v433, 0.0
        %v444 = vmax.f32 %v435, 0.0
        %v445 = vlaneseq
        %v446 = vand.u32 %v445, 127
        %v447 = vadd.s32 %v446, 128
        %p448 = scmp.eq.s32.totalorder %s23, 0
        %s449 = scalar_select %p448, 17, 1
        %p450 = scmp.eq.s32.totalorder %s23, 1
        %s451 = scalar_select %p450, 145, 161
        %v452 = vstv %s449
        %vm453 = vcmp.ge.s32.totalorder %v446, %v452
        %vm454 = vcmp.ge.s32.totalorder %v447, %v452
        %v455 = vstv %s451
        %vm456 = vcmp.lt.s32.totalorder %v446, %v455
        %vm457 = vcmp.lt.s32.totalorder %v447, %v455
        %vm458 = vmand %vm453, %vm456
        %vm459 = vmand %vm454, %vm457
        %v460 = vsel %vm458, 1, 0
        %v461 = vsel %vm459, 1, 0
        %vm462 = vcmp.eq.s32.totalorder %v460, 1
        %vm463 = vcmp.eq.s32.totalorder %v461, 1
        %v464 = vsel %vm462, %v437, 0.0
        %v465 = vsel %vm463, %v438, 0.0
        %v466 = vsel %vm462, %v439, 0.0
        %v467 = vsel %vm463, %v440, 0.0
        %v468 = vsel %vm462, %v441, 0.0
        %v469 = vsel %vm463, %v442, 0.0
        %v470 = vsel %vm462, %v443, 0.0
        %v471 = vsel %vm463, %v444, 0.0
        %v472 = vpack.c.bf16 %v466, %v464
        %v473 = vpack.c.bf16 %v467, %v465
        %v474 = vpack.c.bf16 %v470, %v468
        %v475 = vpack.c.bf16 %v471, %v469
        %vm476 = vcmp.lt.s32.totalorder %v446, 0
        %v477 = vsub.s32 0, %v446
        %v478 = vsel %vm476, %v477, %v446
        %v479 = vshrl.u32 %v478, 4
        %v480 = vand.u32 %v478, 15
        %v481 = vsub.s32 0, %v480
        %v482 = vsel %vm476, %v481, %v480
        %vm483 = vcmp.ne.s32.totalorder %v482, 0
        %vm484 = vcmp.lt.s32.totalorder %v482, 0
        %vm485 = vmand %vm484, %vm483
        %v486 = vadd.s32 %v482, 16
        %v487 = vsel %vm485, %v486, %v482
        %vm488 = vcmp.ne.s32.totalorder %v487, 0
        %v489 = vsel %vm488, 1, 0
        %v490 = vcvt.s32.f32 %v489
        %v491 = vpack.c.bf16 %v490, %v490
        %vm492 = vcmp.ne.s32.totalorder %v487, 15
        %v493 = vsel %vm492, 1, 0
        %v494 = vcvt.s32.f32 %v493
        %v495 = vpack.c.bf16 %v494, %v494
        %v496 = vmul.bf16 %v472, %v491
        %v497 = vmul.bf16 %v474, %v491
        %499 = vrot.lane.b32.xlu0 %v495, 2
        %v500 = vpop.permute.xlu0 %499
        %v502 = vmul.bf16 %v472, %v500
        %v503 = vmul.bf16 %v473, %v500
        %v504 = vmul.bf16 %v474, %v500
        %v505 = vmul.bf16 %v475, %v500
        %507 = vrot.lane.b32.xlu0 %v491, 16
        %v508 = vpop.permute.xlu0 %507
        %v510 = vmul.bf16 %v472, %v508
        %v511 = vmul.bf16 %v473, %v508
        %v512 = vmul.bf16 %v474, %v508
        %v513 = vmul.bf16 %v475, %v508
        %514 = vrot.lane.b32.xlu0 %v495, 18
        %v515 = vpop.permute.xlu0 %514
        %v517 = vmul.bf16 %v472, %v515
        %v518 = vmul.bf16 %v473, %v515
        %v519 = vmul.bf16 %v474, %v515
        %v520 = vmul.bf16 %v475, %v515
        %521 = vrot.lane.b32.xlu0 %v491, 32
        %v522 = vpop.permute.xlu0 %521
        %v524 = vmul.bf16 %v472, %v522
        %v525 = vmul.bf16 %v473, %v522
        %v526 = vmul.bf16 %v474, %v522
        %v527 = vmul.bf16 %v475, %v522
        %528 = vrot.lane.b32.xlu0 %v495, 34
        %v529 = vpop.permute.xlu0 %528
        %v531 = vmul.bf16 %v472, %v529
        %v532 = vmul.bf16 %v473, %v529
        %v533 = vmul.bf16 %v474, %v529
        %v534 = vmul.bf16 %v475, %v529
        %539 = vrot.lane.b32.xlu0 %v472, 127
        %v540 = vpop.permute.xlu0 %539
        %541 = vrot.lane.b32.xlu0 %v473, 127
        %v542 = vpop.permute.xlu0 %541
        %543 = vrot.lane.b32.xlu0 %v474, 127
        %v544 = vpop.permute.xlu0 %543
        %545 = vrot.lane.b32.xlu0 %v475, 127
        %v546 = vpop.permute.xlu0 %545
        %vm547 = vcmask 1039360
        %v548 = vsel %vm547, %v540, %v542
        %v549 = vsel %vm547, %v544, %v546
        %556 = vrot.lane.b32.xlu0 %v502, 126
        %v557 = vpop.permute.xlu0 %556
        %558 = vrot.lane.b32.xlu0 %v503, 126
        %v559 = vpop.permute.xlu0 %558
        %560 = vrot.lane.b32.xlu0 %v504, 126
        %v561 = vpop.permute.xlu0 %560
        %562 = vrot.lane.b32.xlu0 %v505, 126
        %v563 = vpop.permute.xlu0 %562
        %vm564 = vcmask 1031168
        %v565 = vsel %vm564, %v557, %v559
        %v566 = vsel %vm564, %v561, %v563
        %573 = vrot.lane.b32.xlu0 %v510, 112
        %v574 = vpop.permute.xlu0 %573
        %575 = vrot.lane.b32.xlu0 %v511, 112
        %v576 = vpop.permute.xlu0 %575
        %577 = vrot.lane.b32.xlu0 %v512, 112
        %v578 = vpop.permute.xlu0 %577
        %579 = vrot.lane.b32.xlu0 %v513, 112
        %v580 = vpop.permute.xlu0 %579
        %vm581 = vcmask 916480
        %v582 = vsel %vm581, %v574, %v576
        %v583 = vsel %vm581, %v578, %v580
        %586 = vrot.lane.b32.xlu0 %v472, 111
        %v587 = vpop.permute.xlu0 %586
        %588 = vrot.lane.b32.xlu0 %v473, 111
        %v589 = vpop.permute.xlu0 %588
        %590 = vrot.lane.b32.xlu0 %v474, 111
        %v591 = vpop.permute.xlu0 %590
        %592 = vrot.lane.b32.xlu0 %v475, 111
        %v593 = vpop.permute.xlu0 %592
        %vm594 = vcmask 908288
        %v595 = vsel %vm594, %v587, %v589
        %v596 = vsel %vm594, %v591, %v593
        %603 = vrot.lane.b32.xlu0 %v517, 110
        %v604 = vpop.permute.xlu0 %603
        %605 = vrot.lane.b32.xlu0 %v518, 110
        %v606 = vpop.permute.xlu0 %605
        %607 = vrot.lane.b32.xlu0 %v519, 110
        %v608 = vpop.permute.xlu0 %607
        %609 = vrot.lane.b32.xlu0 %v520, 110
        %v610 = vpop.permute.xlu0 %609
        %vm611 = vcmask 900096
        %v612 = vsel %vm611, %v604, %v606
        %v613 = vsel %vm611, %v608, %v610
        %620 = vrot.lane.b32.xlu0 %v524, 96
        %v621 = vpop.permute.xlu0 %620
        %622 = vrot.lane.b32.xlu0 %v525, 96
        %v623 = vpop.permute.xlu0 %622
        %624 = vrot.lane.b32.xlu0 %v526, 96
        %v625 = vpop.permute.xlu0 %624
        %626 = vrot.lane.b32.xlu0 %v527, 96
        %v627 = vpop.permute.xlu0 %626
        %vm628 = vcmask 785408
        %v629 = vsel %vm628, %v621, %v623
        %v630 = vsel %vm628, %v625, %v627
        %633 = vrot.lane.b32.xlu0 %v472, 95
        %v634 = vpop.permute.xlu0 %633
        %635 = vrot.lane.b32.xlu0 %v473, 95
        %v636 = vpop.permute.xlu0 %635
        %637 = vrot.lane.b32.xlu0 %v474, 95
        %v638 = vpop.permute.xlu0 %637
        %639 = vrot.lane.b32.xlu0 %v475, 95
        %v640 = vpop.permute.xlu0 %639
        %vm641 = vcmask 777216
        %v642 = vsel %vm641, %v634, %v636
        %v643 = vsel %vm641, %v638, %v640
        %650 = vrot.lane.b32.xlu0 %v531, 94
        %v651 = vpop.permute.xlu0 %650
        %652 = vrot.lane.b32.xlu0 %v532, 94
        %v653 = vpop.permute.xlu0 %652
        %654 = vrot.lane.b32.xlu0 %v533, 94
        %v655 = vpop.permute.xlu0 %654
        %656 = vrot.lane.b32.xlu0 %v534, 94
        %v657 = vpop.permute.xlu0 %656
        %vm658 = vcmask 769024
        %v659 = vsel %vm658, %v651, %v653
        %v660 = vsel %vm658, %v655, %v657
        %v663 = vld [vmem:[%s3] sm:$0xff]
        %v664 = vld [vmem:[%s3 + $0x8] sm:$0xf]
        %v665 = vld [vmem:[%s3 + $0xc] sm:$0xff]
        %v666 = vld [vmem:[%s3 + $0x14] sm:$0xf]
        %v667 = vld [vmem:[%s3 + $0x18] sm:$0xff]
        %v668 = vld [vmem:[%s3 + $0x20] sm:$0xf]
        %v669 = vld [vmem:[%s3 + $0x24] sm:$0xff]
        %v670 = vld [vmem:[%s3 + $0x2c] sm:$0xf]
        %v671 = vld [vmem:[%s4] sm:$0xff]
        %v672 = vld [vmem:[%s4 + $0x8] sm:$0xff]
        %v673 = vld [vmem:[%s4 + $0x10] sm:$0xff]
        %v674 = vld [vmem:[%s4 + $0x18] sm:$0xff]
        %676 = vset.pattern.permute.xlu0 0
        %677 = vperm.xlu0 %676, %v671
        %v678 = vpop.permute.xlu0 %677
        %681 = vset.pattern.permute.xlu0 0
        %682 = vperm.xlu0 %681, %v672
        %v683 = vpop.permute.xlu0 %682
        %686 = vset.pattern.permute.xlu0 0
        %687 = vperm.xlu0 %686, %v673
        %v688 = vpop.permute.xlu0 %687
        %691 = vset.pattern.permute.xlu0 0
        %692 = vperm.xlu0 %691, %v674
        %v693 = vpop.permute.xlu0 %692
        %v703 = vunpack.c.l.b16 %v663
        %v704 = vunpack.c.h.b16 %v663
        %v705 = vunpack.c.l.b16 %v664
        %v706 = vunpack.c.l.b16 %v665
        %v707 = vunpack.c.h.b16 %v665
        %v708 = vunpack.c.l.b16 %v666
        %v709 = vunpack.c.l.b16 %v667
        %v710 = vunpack.c.h.b16 %v667
        %v711 = vunpack.c.l.b16 %v668
        %v712 = vunpack.c.l.b16 %v669
        %v713 = vunpack.c.h.b16 %v669
        %v714 = vunpack.c.l.b16 %v670
        %v715 = vpack.c.b16 %v706, %v703
        %v716 = vpack.c.b16 %v707, %v704
        %v717 = vpack.c.b16 %v708, %v705
        %v718 = vpack.c.b16 %v712, %v709
        %v719 = vpack.c.b16 %v713, %v710
        %v720 = vpack.c.b16 %v714, %v711
        %vm725 = vcmask 261120
        %v727 = vsel %vm725, %v717, 0
        %v730 = vsel %vm725, %v720, 0
        %732 = vmatprep.subr.bf16.mxu0 0
        %733 = vmatpush1.bf16.msra.mxu0 %v496
        %734 = vmatprep.subr.bf16.mxu0 0
        %735 = vmatpush1.bf16.msra.mxu0 %v497
        %736 = vmatprep.subr.bf16.mxu0 0
        %737 = vmatpush1.bf16.msra.mxu0 %v548
        %738 = vmatprep.subr.bf16.mxu0 0
        %739 = vmatpush1.bf16.msra.mxu0 %v549
        %740 = vmatprep.subr.bf16.mxu0 0
        %741 = vmatpush1.bf16.msra.mxu0 %v565
        %742 = vmatprep.subr.bf16.mxu0 0
        %743 = vmatpush1.bf16.msra.mxu0 %v566
        %744 = vmatprep.subr.bf16.mxu0 0
        %745 = vmatpush1.bf16.msra.mxu0 %v582
        %746 = vmatprep.subr.bf16.mxu0 0
        %747 = vmatpush1.bf16.msra.mxu0 %v583
        %748 = vmatprep.subr.bf16.mxu0 0
        %749 = vmatpush1.bf16.msra.mxu0 %v595
        %750 = vmatprep.subr.bf16.mxu0 0
        %751 = vmatpush1.bf16.msra.mxu0 %v596
        %752 = vmatprep.subr.bf16.mxu0 0
        %753 = vmatpush1.bf16.msra.mxu0 %v612
        %754 = vmatprep.subr.bf16.mxu0 0
        %755 = vmatpush1.bf16.msra.mxu0 %v613
        %756 = vmatprep.subr.bf16.mxu0 0
        %757 = vmatpush1.bf16.msra.mxu0 %v629
        %758 = vmatprep.subr.bf16.mxu0 0
        %759 = vmatpush1.bf16.msra.mxu0 %v630
        %760 = vmatprep.subr.bf16.mxu0 0
        %761 = vmatpush1.bf16.msra.mxu0 %v642
        %762 = vmatprep.subr.bf16.mxu0 0
        %763 = vmatpush1.bf16.msra.mxu0 %v643
        %764 = vmatprep.mubr.bf16.mxu0 %v716
        %765 = vmatmul.mubr.bf16.gmra.mrb[0].mxu0 %v715
        %v766 = vpop.f32.mrb[0].mxu0
        %v767 = vadd.f32 %v678, %v766
        %v768 = vpop.f32.mrb[0].mxu0
        %v769 = vpop.f32.mrb[0].mxu0
        %v770 = vadd.f32 %v683, %v769
        %v771 = vpop.f32.mrb[0].mxu0
        %772 = vmatprep.mubr.bf16.mxu0 %v719
        %773 = vmatmul.mubr.bf16.gmra.mrb[0].mxu0 %v718
        %v774 = vpop.f32.mrb[0].mxu0
        %v775 = vadd.f32 %v688, %v774
        %v776 = vpop.f32.mrb[0].mxu0
        %v777 = vpop.f32.mrb[0].mxu0
        %v778 = vadd.f32 %v693, %v777
        %v779 = vpop.f32.mrb[0].mxu0
        %780 = vdwg.mxu0
        %781 = vmatprep.subr.bf16.mxu0 0
        %782 = vmatpush1.bf16.msra.mxu0 %v659
        %783 = vmatprep.subr.bf16.mxu0 0
        %784 = vmatpush1.bf16.msra.mxu0 %v660
        %785 = vmatprep.subr.bf16.mxu0 0
        %786 = vmatpush1.bf16.msra.mxu0 0
        %787 = vmatprep.subr.bf16.mxu0 0
        %788 = vmatpush1.bf16.msra.mxu0 0
        %789 = vmatprep.subr.bf16.mxu0 0
        %790 = vmatpush1.bf16.msra.mxu0 0
        %791 = vmatprep.subr.bf16.mxu0 0
        %792 = vmatpush1.bf16.msra.mxu0 0
        %793 = vmatprep.subr.bf16.mxu0 0
        %794 = vmatpush1.bf16.msra.mxu0 0
        %795 = vmatprep.subr.bf16.mxu0 0
        %796 = vmatpush1.bf16.msra.mxu0 0
        %797 = vmatprep.subr.bf16.mxu0 0
        %798 = vmatpush1.bf16.msra.mxu0 0
        %799 = vmatprep.subr.bf16.mxu0 0
        %800 = vmatpush1.bf16.msra.mxu0 0
        %801 = vmatprep.subr.bf16.mxu0 0
        %802 = vmatpush1.bf16.msra.mxu0 0
        %803 = vmatprep.subr.bf16.mxu0 0
        %804 = vmatpush1.bf16.msra.mxu0 0
        %805 = vmatprep.subr.bf16.mxu0 0
        %806 = vmatpush1.bf16.msra.mxu0 0
        %807 = vmatprep.subr.bf16.mxu0 0
        %808 = vmatpush1.bf16.msra.mxu0 0
        %809 = vmatprep.subr.bf16.mxu0 0
        %810 = vmatpush1.bf16.msra.mxu0 0
        %811 = vmatprep.subr.bf16.mxu0 0
        %812 = vmatpush1.bf16.msra.mxu0 0
        %813 = vmatprep.mubr.bf16.mxu0 0
        %814 = vmatmul.mubr.bf16.gmra.mrb[0].mxu0 %v727
        %v815 = vpop.f32.mrb[0].mxu0
        %v816 = vadd.f32 %v767, %v815
        %v817 = vpop.f32.mrb[0].mxu0
        %v818 = vpop.f32.mrb[0].mxu0
        %v819 = vadd.f32 %v770, %v818
        %v820 = vpop.f32.mrb[0].mxu0
        %821 = vmatprep.mubr.bf16.mxu0 0
        %822 = vmatmul.mubr.bf16.gmra.mrb[0].mxu0 %v730
        %v823 = vpop.f32.mrb[0].mxu0
        %v824 = vadd.f32 %v775, %v823
        %v825 = vpop.f32.mrb[0].mxu0
        %v826 = vpop.f32.mrb[0].mxu0
        %v827 = vadd.f32 %v778, %v826
        %v828 = vpop.f32.mrb[0].mxu0
        %829 = vdwg.mxu0
        %v830 = vmax.f32 %v816, 0.0
        %v831 = vmax.f32 %v819, 0.0
        %v832 = vmax.f32 %v824, 0.0
        %v833 = vmax.f32 %v827, 0.0
        %v834 = vpack.c.bf16 %v831, %v830
        %v835 = vpack.c.bf16 %v833, %v832
        %v836 = vld [vmem:[%s5] sm:$0xf]
        %v837 = vld [vmem:[%s5 + $0x4] sm:$0xf]
        %v838 = vld [vmem:[%s5 + $0x8] sm:$0xf]
        %v839 = vld [vmem:[%s5 + $0xc] sm:$0xf]
        %v840 = vld [vmem:[%s5 + $0x10] sm:$0xf]
        %v841 = vld [vmem:[%s5 + $0x14] sm:$0xf]
        %v842 = vld [vmem:[%s5 + $0x18] sm:$0xf]
        %v843 = vld [vmem:[%s5 + $0x1c] sm:$0xf]
        %v844 = vld [vmem:[%s5 + $0x20] sm:$0xf]
        %v845 = vld [vmem:[%s5 + $0x24] sm:$0xf]
        %v846 = vld [vmem:[%s5 + $0x28] sm:$0xf]
        %v847 = vld [vmem:[%s6] sm:$0xff]
        %v848 = vld [vmem:[%s6 + $0x8] sm:$0xff]
        %v849 = vld [vmem:[%s6 + $0x10] sm:$0xff]
        %v850 = vld [vmem:[%s6 + $0x18] sm:$0xff]
        %v851 = vld [vmem:[%s6 + $0x20] sm:$0xff]
        %v852 = vld [vmem:[%s6 + $0x28] sm:$0xff]
        %v853 = vld [vmem:[%s6 + $0x30] sm:$0xff]
        %v854 = vld [vmem:[%s6 + $0x38] sm:$0xff]
        %v855 = vld [vmem:[%s6 + $0x40] sm:$0xff]
        %v856 = vld [vmem:[%s6 + $0x48] sm:$0xff]
        %v857 = vld [vmem:[%s6 + $0x50] sm:$0xff]
        %859 = vset.pattern.permute.xlu0 0
        %860 = vperm.xlu0 %859, %v847
        %v861 = vpop.permute.xlu0 %860
        %864 = vset.pattern.permute.xlu0 0
        %865 = vperm.xlu0 %864, %v848
        %v866 = vpop.permute.xlu0 %865
        %869 = vset.pattern.permute.xlu0 0
        %870 = vperm.xlu0 %869, %v849
        %v871 = vpop.permute.xlu0 %870
        %874 = vset.pattern.permute.xlu0 0
        %875 = vperm.xlu0 %874, %v850
        %v876 = vpop.permute.xlu0 %875
        %879 = vset.pattern.permute.xlu0 0
        %880 = vperm.xlu0 %879, %v851
        %v881 = vpop.permute.xlu0 %880
        %884 = vset.pattern.permute.xlu0 0
        %885 = vperm.xlu0 %884, %v852
        %v886 = vpop.permute.xlu0 %885
        %889 = vset.pattern.permute.xlu0 0
        %890 = vperm.xlu0 %889, %v853
        %v891 = vpop.permute.xlu0 %890
        %894 = vset.pattern.permute.xlu0 0
        %895 = vperm.xlu0 %894, %v854
        %v896 = vpop.permute.xlu0 %895
        %899 = vset.pattern.permute.xlu0 0
        %900 = vperm.xlu0 %899, %v855
        %v901 = vpop.permute.xlu0 %900
        %904 = vset.pattern.permute.xlu0 0
        %905 = vperm.xlu0 %904, %v856
        %v906 = vpop.permute.xlu0 %905
        %909 = vset.pattern.permute.xlu0 0
        %910 = vperm.xlu0 %909, %v857
        %v911 = vpop.permute.xlu0 %910
        %v924 = vunpack.c.l.b16 %v836
        %v925 = vunpack.c.l.b16 %v837
        %v926 = vunpack.c.l.b16 %v838
        %v927 = vunpack.c.l.b16 %v839
        %v928 = vunpack.c.l.b16 %v840
        %v929 = vunpack.c.l.b16 %v841
        %v930 = vunpack.c.l.b16 %v842
        %v931 = vunpack.c.l.b16 %v843
        %v932 = vunpack.c.l.b16 %v844
        %v933 = vunpack.c.l.b16 %v845
        %v934 = vunpack.c.l.b16 %v846
        %v935 = vpack.c.b16 %v925, %v924
        %v936 = vpack.c.b16 %v927, %v926
        %v937 = vpack.c.b16 %v929, %v928
        %v938 = vpack.c.b16 %v931, %v930
        %v939 = vpack.c.b16 %v933, %v932
        %v940 = vpack.c.b16 %v934, %v934
        %v942 = vsel %vm725, %v935, 0
        %v945 = vsel %vm725, %v936, 0
        %v948 = vsel %vm725, %v937, 0
        %v951 = vsel %vm725, %v938, 0
        %v954 = vsel %vm725, %v939, 0
        %v957 = vsel %vm725, %v940, 0
        %959 = vmatprep.subr.bf16.mxu0 0
        %960 = vmatpush1.bf16.msra.mxu0 %v834
        %961 = vmatprep.subr.bf16.mxu0 0
        %962 = vmatpush1.bf16.msra.mxu0 %v835
        %963 = vmatprep.subr.bf16.mxu0 0
        %964 = vmatpush1.bf16.msra.mxu0 0
        %965 = vmatprep.subr.bf16.mxu0 0
        %966 = vmatpush1.bf16.msra.mxu0 0
        %967 = vmatprep.subr.bf16.mxu0 0
        %968 = vmatpush1.bf16.msra.mxu0 0
        %969 = vmatprep.subr.bf16.mxu0 0
        %970 = vmatpush1.bf16.msra.mxu0 0
        %971 = vmatprep.subr.bf16.mxu0 0
        %972 = vmatpush1.bf16.msra.mxu0 0
        %973 = vmatprep.subr.bf16.mxu0 0
        %974 = vmatpush1.bf16.msra.mxu0 0
        %975 = vmatprep.subr.bf16.mxu0 0
        %976 = vmatpush1.bf16.msra.mxu0 0
        %977 = vmatprep.subr.bf16.mxu0 0
        %978 = vmatpush1.bf16.msra.mxu0 0
        %979 = vmatprep.subr.bf16.mxu0 0
        %980 = vmatpush1.bf16.msra.mxu0 0
        %981 = vmatprep.subr.bf16.mxu0 0
        %982 = vmatpush1.bf16.msra.mxu0 0
        %983 = vmatprep.subr.bf16.mxu0 0
        %984 = vmatpush1.bf16.msra.mxu0 0
        %985 = vmatprep.subr.bf16.mxu0 0
        %986 = vmatpush1.bf16.msra.mxu0 0
        %987 = vmatprep.subr.bf16.mxu0 0
        %988 = vmatpush1.bf16.msra.mxu0 0
        %989 = vmatprep.subr.bf16.mxu0 0
        %990 = vmatpush1.bf16.msra.mxu0 0
        %991 = vmatprep.mubr.bf16.mxu0 0
        %992 = vmatmul.mubr.bf16.gmra.mrb[0].mxu0 %v942
        %v993 = vpop.f32.mrb[0].mxu0
        %v994 = vadd.f32 %v861, %v993
        %v995 = vpop.f32.mrb[0].mxu0
        %v996 = vpop.f32.mrb[0].mxu0
        %v997 = vadd.f32 %v866, %v996
        %v998 = vpop.f32.mrb[0].mxu0
        %999 = vmatprep.mubr.bf16.mxu0 0
        %1000 = vmatmul.mubr.bf16.gmra.mrb[0].mxu0 %v945
        %v1001 = vpop.f32.mrb[0].mxu0
        %v1002 = vadd.f32 %v871, %v1001
        %v1003 = vpop.f32.mrb[0].mxu0
        %v1004 = vpop.f32.mrb[0].mxu0
        %v1005 = vadd.f32 %v876, %v1004
        %v1006 = vpop.f32.mrb[0].mxu0
        %1007 = vmatprep.mubr.bf16.mxu0 0
        %1008 = vmatmul.mubr.bf16.gmra.mrb[0].mxu0 %v948
        %v1009 = vpop.f32.mrb[0].mxu0
        %v1010 = vadd.f32 %v881, %v1009
        %v1011 = vpop.f32.mrb[0].mxu0
        %v1012 = vpop.f32.mrb[0].mxu0
        %v1013 = vadd.f32 %v886, %v1012
        %v1014 = vpop.f32.mrb[0].mxu0
        %1015 = vmatprep.mubr.bf16.mxu0 0
        %1016 = vmatmul.mubr.bf16.gmra.mrb[0].mxu0 %v951
        %v1017 = vpop.f32.mrb[0].mxu0
        %v1018 = vadd.f32 %v891, %v1017
        %v1019 = vpop.f32.mrb[0].mxu0
        %v1020 = vpop.f32.mrb[0].mxu0
        %v1021 = vadd.f32 %v896, %v1020
        %v1022 = vpop.f32.mrb[0].mxu0
        %1023 = vmatprep.mubr.bf16.mxu0 0
        %1024 = vmatmul.mubr.bf16.gmra.mrb[0].mxu0 %v954
        %v1025 = vpop.f32.mrb[0].mxu0
        %v1026 = vadd.f32 %v901, %v1025
        %v1027 = vpop.f32.mrb[0].mxu0
        %v1028 = vpop.f32.mrb[0].mxu0
        %v1029 = vadd.f32 %v906, %v1028
        %v1030 = vpop.f32.mrb[0].mxu0
        %1031 = vmatprep.mubr.bf16.mxu0 0
        %1032 = vmatmul.mubr.bf16.gmra.mrb[0].mxu0 %v957
        %v1033 = vpop.f32.mrb[0].mxu0
        %v1034 = vadd.f32 %v911, %v1033
        %v1035 = vpop.f32.mrb[0].mxu0
        %v1036 = vpop.f32.mrb[0].mxu0
        %v1037 = vpop.f32.mrb[0].mxu0
        %1038 = vdwg.mxu0
        %1039 = vst [vmem:[%s291] sm:$0xff] %v994
        %1040 = vst [vmem:[%s291 + $0x8] sm:$0xff] %v997
        %1041 = vst [vmem:[%s291 + $0x10] sm:$0xff] %v1002
        %1042 = vst [vmem:[%s291 + $0x18] sm:$0xff] %v1005
        %1043 = vst [vmem:[%s291 + $0x20] sm:$0xff] %v1010
        %1044 = vst [vmem:[%s291 + $0x28] sm:$0xff] %v1013
        %1045 = vst [vmem:[%s291 + $0x30] sm:$0xff] %v1018
        %1046 = vst [vmem:[%s291 + $0x38] sm:$0xff] %v1021
        %1047 = vst [vmem:[%s291 + $0x40] sm:$0xff] %v1026
        %1048 = vst [vmem:[%s291 + $0x48] sm:$0xff] %v1029
        %1049 = vst [vmem:[%s291 + $0x50] sm:$0xff] %v1034
        %s1050 = sand.u32 %s194, 1
        %s1051 = sand.u32 %s194, 1
        %s1052 = smul.addr %s1051, 88
        %s1053 = scalar_lea.vmem [#allocation2], %s1052
        // Predicated region
        $region49: #{faster_rcnn_forward.1} parent=47 // pred_check
          %p1054 = pneg %p204
        $region50: #{faster_rcnn_forward.1} parent=47 // pred_check_branch
          %1056 = sbr.rel (%p1054) target = $region52
        $region51: #{faster_rcnn_forward.1} parent=47 // pred_region
          %s1057 = smul.addr %s22, 22
          %s1058 = sadd.s32 %s23, %s1057
          %s1059 = smul.addr %s1058, 8
          %s1060 = scalar_lea.vmem %s7, %s1059
          // Predicated region
          $region53: #{faster_rcnn_forward.1} parent=51 // pred_check
            _
          $region54: #{faster_rcnn_forward.1} parent=51 // pred_check_branch
            %1062 = sbr.rel (0) target = $region56
          $region55: #{faster_rcnn_forward.1} parent=51 // pred_region
            // Predicated region
            $region57: #{faster_rcnn_forward.1} parent=55 // pred_check
              _
            $region58: #{faster_rcnn_forward.1} parent=55 // pred_check_branch
              %1064 = sbr.rel (0) target = $region60
            $region59: #{faster_rcnn_forward.1} parent=55 // pred_region
              // Predicated region
              $region72: #{faster_rcnn_forward.1} parent=59 // pred_check
                _
              $region73: #{faster_rcnn_forward.1} parent=59 // pred_check_branch
                %1099 = sbr.rel (0) target = $region75
              $region74: #{faster_rcnn_forward.1} parent=59 // pred_region
                loop: start=0, step=1, limit=1
                $region76: #{faster_rcnn_forward.1} parent=74 // loop_pre_header
                  _
                $region77: #{faster_rcnn_forward.1} parent=74 // loop_header
                  %s1101 = sphi 0, %s1105
                  %p1102 = scmp.ge.s32.totalorder %s1101, 1
                  %s1106 = sphi %s1053, %s1053
                  %s1107 = sphi %s1060, %s1060
                $region78: #{faster_rcnn_forward.1} parent=74 // loop_header_branch
                  %1104 = sbr.rel (%p1102) target = $region82
                $region79: #{faster_rcnn_forward.1} parent=74 // loop_body
                  %v1108 = vld [vmem:[%s1106] sm:$0xff]
                  %1109 = vst [vmem:[%s1107] sm:$0xff] %v1108
                  %v1110 = vld [vmem:[%s1106 + $0x8] sm:$0xff]
                  %1111 = vst [vmem:[%s1107 + $0x10] sm:$0xff] %v1110
                  %v1112 = vld [vmem:[%s1106 + $0x10] sm:$0xff]
                  %1113 = vst [vmem:[%s1107 + $0x20] sm:$0xff] %v1112
                  %v1114 = vld [vmem:[%s1106 + $0x18] sm:$0xff]
                  %1115 = vst [vmem:[%s1107 + $0x30] sm:$0xff] %v1114
                  %v1116 = vld [vmem:[%s1106 + $0x20] sm:$0xff]
                  %1117 = vst [vmem:[%s1107 + $0x40] sm:$0xff] %v1116
                  %v1118 = vld [vmem:[%s1106 + $0x28] sm:$0xff]
                  %1119 = vst [vmem:[%s1107 + $0x50] sm:$0xff] %v1118
                  %v1120 = vld [vmem:[%s1106 + $0x30] sm:$0xff]
                  %1121 = vst [vmem:[%s1107 + $0x60] sm:$0xff] %v1120
                  %v1122 = vld [vmem:[%s1106 + $0x38] sm:$0xff]
                  %1123 = vst [vmem:[%s1107 + $0x70] sm:$0xff] %v1122
                  %v1124 = vld [vmem:[%s1106 + $0x40] sm:$0xff]
                  %1125 = vst [vmem:[%s1107 + $0x80] sm:$0xff] %v1124
                  %v1126 = vld [vmem:[%s1106 + $0x48] sm:$0xff]
                  %1127 = vst [vmem:[%s1107 + $0x90] sm:$0xff] %v1126
                  %v1128 = vld [vmem:[%s1106 + $0x50] sm:$0xff]
                  %1129 = vst [vmem:[%s1107 + $0xa0] sm:$0xff] %v1128
                $region80: #{faster_rcnn_forward.1} parent=74 // loop_footer
                  %s1105 = sadd.s32 1, %s1101
                $region81: #{faster_rcnn_forward.1} parent=74 // loop_footer_branch
                  %1100 = sbr.rel target = $region77
                $region82: #{faster_rcnn_forward.1} parent=74 // loop_exit
                  _
              $region75: #{faster_rcnn_forward.1} parent=59 // pred_fallthru
                _
              // Predicated region
              $region83: #{faster_rcnn_forward.1} parent=59 // pred_check
                _
              $region84: #{faster_rcnn_forward.1} parent=59 // pred_check_branch
                %1131 = sbr.rel target = $region86
              $region85: #{faster_rcnn_forward.1} parent=59 // pred_region
                _
              $region86: #{faster_rcnn_forward.1} parent=59 // pred_fallthru
                _
            $region60: #{faster_rcnn_forward.1} parent=55 // pred_fallthru
              _
            // Predicated region
            $region61: #{faster_rcnn_forward.1} parent=55 // pred_check
              _
            $region62: #{faster_rcnn_forward.1} parent=55 // pred_check_branch
              %1066 = sbr.rel target = $region64
            $region63: #{faster_rcnn_forward.1} parent=55 // pred_region
              loop: start=0, step=1, limit=1
              $region65: #{faster_rcnn_forward.1} parent=63 // loop_pre_header
                _
              $region66: #{faster_rcnn_forward.1} parent=63 // loop_header
                %s1069 = sphi 0, %s1073
                %p1070 = scmp.ge.s32.totalorder %s1069, 1
                %s1074 = sphi %s1053, %s1053
                %s1075 = sphi %s1060, %s1060
              $region67: #{faster_rcnn_forward.1} parent=63 // loop_header_branch
                %1072 = sbr.rel (%p1070) target = $region71
              $region68: #{faster_rcnn_forward.1} parent=63 // loop_body
                %v1076 = vld [vmem:[%s1074] sm:$0xff]
                %1077 = vst [vmem:[%s1075] sm:$0xff] %v1076
                %v1078 = vld [vmem:[%s1074 + $0x8] sm:$0xff]
                %1079 = vst [vmem:[%s1075 + $0x10] sm:$0xff] %v1078
                %v1080 = vld [vmem:[%s1074 + $0x10] sm:$0xff]
                %1081 = vst [vmem:[%s1075 + $0x20] sm:$0xff] %v1080
                %v1082 = vld [vmem:[%s1074 + $0x18] sm:$0xff]
                %1083 = vst [vmem:[%s1075 + $0x30] sm:$0xff] %v1082
                %v1084 = vld [vmem:[%s1074 + $0x20] sm:$0xff]
                %1085 = vst [vmem:[%s1075 + $0x40] sm:$0xff] %v1084
                %v1086 = vld [vmem:[%s1074 + $0x28] sm:$0xff]
                %1087 = vst [vmem:[%s1075 + $0x50] sm:$0xff] %v1086
                %v1088 = vld [vmem:[%s1074 + $0x30] sm:$0xff]
                %1089 = vst [vmem:[%s1075 + $0x60] sm:$0xff] %v1088
                %v1090 = vld [vmem:[%s1074 + $0x38] sm:$0xff]
                %1091 = vst [vmem:[%s1075 + $0x70] sm:$0xff] %v1090
                %v1092 = vld [vmem:[%s1074 + $0x40] sm:$0xff]
                %1093 = vst [vmem:[%s1075 + $0x80] sm:$0xff] %v1092
                %v1094 = vld [vmem:[%s1074 + $0x48] sm:$0xff]
                %1095 = vst [vmem:[%s1075 + $0x90] sm:$0xff] %v1094
                %v1096 = vld [vmem:[%s1074 + $0x50] sm:$0xff]
                %1097 = vst [vmem:[%s1075 + $0xa0] sm:$0xff] %v1096
              $region69: #{faster_rcnn_forward.1} parent=63 // loop_footer
                %s1073 = sadd.s32 1, %s1069
              $region70: #{faster_rcnn_forward.1} parent=63 // loop_footer_branch
                %1068 = sbr.rel target = $region66
              $region71: #{faster_rcnn_forward.1} parent=63 // loop_exit
                _
            $region64: #{faster_rcnn_forward.1} parent=55 // pred_fallthru
              _
          $region56: #{faster_rcnn_forward.1} parent=51 // pred_fallthru
            _
          %1132 = vnop
        $region52: #{faster_rcnn_forward.1} parent=47 // pred_fallthru
          _
      $region48: #{faster_rcnn_forward.1} parent=5 // pred_fallthru
        _
      %p1133 = scmp.le.s32.totalorder 2, %s13
      // Predicated region
      $region87: #{faster_rcnn_forward.1} parent=5 // pred_check
        %p1134 = pneg %p1133
      $region88: #{faster_rcnn_forward.1} parent=5 // pred_check_branch
        %1136 = sbr.rel (%p1134) target = $region90
      $region89: #{faster_rcnn_forward.1} parent=5 // pred_region
        %s1137 = ssub.s32 %s13, 2
        // Predicated region
        $region91: #{faster_rcnn_forward.1} parent=89 // pred_check
          %p1138 = pneg %p210
        $region92: #{faster_rcnn_forward.1} parent=89 // pred_check_branch
          %1140 = sbr.rel (%p1138) target = $region94
        $region93: #{faster_rcnn_forward.1} parent=89 // pred_region
          %s1141 = sand.u32 %s195, 1
          %s1142 = sand.u32 %s195, 1
          %s1143 = smul.addr %s1142, 88
          %s1144 = scalar_lea.vmem [#allocation2], %s1143
        $region94: #{faster_rcnn_forward.1} parent=89 // pred_fallthru
          _
      $region90: #{faster_rcnn_forward.1} parent=5 // pred_fallthru
        _
    $region6: #{faster_rcnn_forward.1} parent=1 // loop_footer
      %s17 = sadd.s32 1, %s13
    $region7: #{faster_rcnn_forward.1} parent=1 // loop_footer_branch
      %12 = sbr.rel target = $region3
    $region8: #{faster_rcnn_forward.1} parent=1 // loop_exit
      _

</llo_original>
